<compile_context>
chip_gen: v6e
topology: v6e:2x2x1
jax: 0.10.0
libtpu: 0.0.40
codegen_flags: <defaults>
</compile_context>

<pallas_src>
import jax
import jax.numpy as jnp
from jax.experimental import pallas as pl
from jax.experimental.pallas import tpu as pltpu


def spatial_attention_kernel(x_ref, w_ref, b_ref, o_ref):
    """One (bn, C, hw_blk) tile: 1x1 conv (C -> 1) + broadcast multiply.

    x_ref: (bn, C, hw_blk)  input tile, pixels lane-dense (VMEM)
    w_ref: (C,)             per-input-channel conv weight, f32 (SMEM)
    b_ref: (1,)             conv bias, f32 (SMEM)
    o_ref: (bn, C, hw_blk)  output tile (VMEM)
    """
    x = x_ref[...]
    xf = x.astype(jnp.float32)                 # f32 accumulation (bf16-safe)
    bn, c_dim, hw = xf.shape
    # Statically unrolled per-channel FMA: attn = b + sum_c w[c] * x[:, c, :]
    # (keeps the reduction on plain VPU adds; w/b are cheap SMEM scalar reads).
    attn = jnp.full((bn, 1, hw), b_ref[0], dtype=jnp.float32)
    for c in range(c_dim):
        attn = attn + w_ref[c] * xf[:, c:c + 1, :]
    # out = x * attn, broadcasting the single attention row over the C channels.
    o_ref[...] = (xf * attn).astype(o_ref.dtype)


def _largest_divisor_leq(total, target):
    b = max(1, min(total, target))
    while total % b:
        b -= 1
    return b


def spatial_attention(x_nchw, w, b):
    """x_nchw: (N, C, H, W); w: (C,); b: scalar  ->  (N, C, H, W)."""
    N, C, H, W = x_nchw.shape
    HW = H * W
    x_flat = x_nchw.reshape(N, C, HW)          # contiguous flatten (free)

    # Lane (pixel) tile: multiple of 128 when possible, capped at 2048 lanes.
    # Double-buffered in+out blocks stay far below v7x's 64 MiB VMEM while
    # being large enough for the HBM roofline on all generations.
    if HW % 128 == 0:
        hw_blk = _largest_divisor_leq(HW // 128, 16) * 128
    else:
        hw_blk = HW                            # full-extent fallback
    # Pack images per block so bn*C fills the 8-sublane vreg group when C < 8.
    bn = _largest_divisor_leq(N, max(1, 8 // max(C, 1)))

    grid = (N // bn, HW // hw_blk)             # (1, 1) at the toy shape

    out_flat = pl.pallas_call(
        spatial_attention_kernel,
        out_shape=jax.ShapeDtypeStruct((N, C, HW), x_flat.dtype),
        grid=grid,
        in_specs=[
            pl.BlockSpec((bn, C, hw_blk), lambda i, j: (i, 0, j)),
            pl.BlockSpec(memory_space=pltpu.MemorySpace.SMEM),   # w (f32)
            pl.BlockSpec(memory_space=pltpu.MemorySpace.SMEM),   # b (f32)
        ],
        out_specs=pl.BlockSpec((bn, C, hw_blk), lambda i, j: (i, 0, j)),
        compiler_params=pltpu.CompilerParams(
            dimension_semantics=("parallel", "parallel")),
    )(x_flat,
      w.reshape(C).astype(jnp.float32),
      jnp.asarray(b, jnp.float32).reshape(1))
    return out_flat.reshape(N, C, H, W)


def spatial_attention_ref(x_nchw, w, b):
    """Pure-JAX reference (matches PyTorch Spatial_Attention.forward)."""
    attn = jnp.einsum('nchw,c->nhw', x_nchw.astype(jnp.float32),
                      w.astype(jnp.float32)) + b
    return (x_nchw.astype(jnp.float32) * attn[:, None, :, :]).astype(x_nchw.dtype)


def init_params(key, in_channel):
    """Deterministic synthetic Conv2d(in_channel, 1, kernel_size=1) params."""
    kw, kb = jax.random.split(key)
    # PyTorch weight layout (1, C, 1, 1) -> (C,)
    w_oihw = 0.1 * jax.random.normal(kw, (1, in_channel, 1, 1), jnp.float32)
    w = w_oihw.reshape(in_channel)
    b = 0.05 * jax.random.normal(kb, (), jnp.float32)
    return w, b


if __name__ == "__main__":
    key = jax.random.PRNGKey(0)
    kx, kp = jax.random.split(key)

    N, C, H, W = 2, 4, 16, 16
    x = jax.random.normal(kx, (N, C, H, W), jnp.float32)
    w, b = init_params(kp, C)

    out = spatial_attention(x, w, b)
    out = jax.block_until_ready(out)

    assert out.shape == (N, C, H, W), out.shape
    assert bool(jnp.all(jnp.isfinite(out)))

    ref = spatial_attention_ref(x, w, b)
    assert bool(jnp.allclose(out, ref, atol=1e-5, rtol=1e-5))

    print("KERNEL_OK")
</pallas_src>

<mosaic_0001>
module attributes {stable_mosaic.version = 11 : i64} {
  func.func @spatial_attention_kernel(%arg0: i32, %arg1: i32, %arg2: memref<2x4x256xf32, #tpu.memory_space<vmem>>, %arg3: memref<4xf32, #tpu.memory_space<smem>>, %arg4: memref<1xf32, #tpu.memory_space<smem>>, %arg5: memref<2x4x256xf32, #tpu.memory_space<vmem>>) attributes {dimension_semantics = [#tpu.dimension_semantics<parallel>, #tpu.dimension_semantics<parallel>], iteration_bounds = array<i64: 1, 1>, scalar_prefetch = 0 : i64, scratch_operands = 0 : i64, tpu.core_type = #tpu.core_type<tc>, window_params = [{transform_indices = @transform_0, window_bounds = array<i64: 2, 4, 256>}, {transform_indices = @transform_1, window_bounds = array<i64: 4>}, {transform_indices = @transform_2, window_bounds = array<i64: 1>}, {transform_indices = @transform_3, window_bounds = array<i64: 2, 4, 256>}]} {
    %c0 = arith.constant 0 : index
    %c0_0 = arith.constant 0 : index
    %c0_1 = arith.constant 0 : index
    %0 = vector.load %arg2[%c0, %c0_0, %c0_1] : memref<2x4x256xf32, #tpu.memory_space<vmem>>, vector<2x4x256xf32>
    %c0_2 = arith.constant 0 : index
    %1 = memref.load %arg4[%c0_2] : memref<1xf32, #tpu.memory_space<smem>>
    %2 = vector.broadcast %1 : f32 to vector<2x1x256xf32>
    %c0_3 = arith.constant 0 : index
    %3 = memref.load %arg3[%c0_3] : memref<4xf32, #tpu.memory_space<smem>>
    %4 = vector.extract_strided_slice %0 {offsets = [0, 0, 0], sizes = [2, 1, 256], strides = [1, 1, 1]} : vector<2x4x256xf32> to vector<2x1x256xf32>
    %5 = vector.broadcast %3 : f32 to vector<2x1x256xf32>
    %6 = arith.mulf %5, %4 : vector<2x1x256xf32>
    %7 = arith.addf %2, %6 : vector<2x1x256xf32>
    %c1 = arith.constant 1 : index
    %8 = memref.load %arg3[%c1] : memref<4xf32, #tpu.memory_space<smem>>
    %9 = vector.extract_strided_slice %0 {offsets = [0, 1, 0], sizes = [2, 1, 256], strides = [1, 1, 1]} : vector<2x4x256xf32> to vector<2x1x256xf32>
    %10 = vector.broadcast %8 : f32 to vector<2x1x256xf32>
    %11 = arith.mulf %10, %9 : vector<2x1x256xf32>
    %12 = arith.addf %7, %11 : vector<2x1x256xf32>
    %c2 = arith.constant 2 : index
    %13 = memref.load %arg3[%c2] : memref<4xf32, #tpu.memory_space<smem>>
    %14 = vector.extract_strided_slice %0 {offsets = [0, 2, 0], sizes = [2, 1, 256], strides = [1, 1, 1]} : vector<2x4x256xf32> to vector<2x1x256xf32>
    %15 = vector.broadcast %13 : f32 to vector<2x1x256xf32>
    %16 = arith.mulf %15, %14 : vector<2x1x256xf32>
    %17 = arith.addf %12, %16 : vector<2x1x256xf32>
    %c3 = arith.constant 3 : index
    %18 = memref.load %arg3[%c3] : memref<4xf32, #tpu.memory_space<smem>>
    %19 = vector.extract_strided_slice %0 {offsets = [0, 3, 0], sizes = [2, 1, 256], strides = [1, 1, 1]} : vector<2x4x256xf32> to vector<2x1x256xf32>
    %20 = vector.broadcast %18 : f32 to vector<2x1x256xf32>
    %21 = arith.mulf %20, %19 : vector<2x1x256xf32>
    %22 = arith.addf %17, %21 : vector<2x1x256xf32>
    %23 = vector.broadcast %22 : vector<2x1x256xf32> to vector<2x4x256xf32>
    %24 = arith.mulf %0, %23 : vector<2x4x256xf32>
    %c0_4 = arith.constant 0 : index
    %c0_5 = arith.constant 0 : index
    %c0_6 = arith.constant 0 : index
    %25 = vector.load %arg5[%c0_4, %c0_5, %c0_6] : memref<2x4x256xf32, #tpu.memory_space<vmem>>, vector<2x4x256xf32>
    tpu.vector_store %arg5[%c0_4, %c0_5, %c0_6], %24 {strides = array<i32>} : memref<2x4x256xf32, #tpu.memory_space<vmem>>, vector<2x4x256xf32>,
    return
  }
  func.func @transform_0(%arg0: i32, %arg1: i32) -> (i32, i32, i32) {
    %c0_i32 = arith.constant 0 : i32
    %c0_i32_0 = arith.constant 0 : i32
    return %arg0, %c0_i32, %arg1 : i32, i32, i32
  }
  func.func @transform_1(%arg0: i32, %arg1: i32) -> i32 {
    %c0_i32 = arith.constant 0 : i32
    %c0_i32_0 = arith.constant 0 : i32
    return %c0_i32 : i32
  }
  func.func @transform_2(%arg0: i32, %arg1: i32) -> i32 {
    %c0_i32 = arith.constant 0 : i32
    %c0_i32_0 = arith.constant 0 : i32
    return %c0_i32 : i32
  }
  func.func @transform_3(%arg0: i32, %arg1: i32) -> (i32, i32, i32) {
    %c0_i32 = arith.constant 0 : i32
    %c0_i32_0 = arith.constant 0 : i32
    return %arg0, %c0_i32, %arg1 : i32, i32, i32
  }
}

</mosaic_0001>

<llo_original>
// kernel: tpu_custom_call.1
$region0: #{tpu_custom_call.1}
  #allocation0 [shape = 'u32[]', space=smem, size = 0x4, offset = 0x4, fixed_abs, tag = 'smem constant byte address 0x4 - core index']
  #allocation1 [shape = 'u32[144,128]{1,0:T(1,128)}', space=vmem, size = 0x12000, scoped, tag = 'internal scratch']
  #allocation2 [shape = 'f32[1]{0:T(128)S(6)}', space=smem, size = 0x200, scoped, tag = 'scoped memory for tpu_custom_call.1']
  %s0 = inlined_call_operand.hbm [shape: f32[2,4,256], index: 0, kind: input, shape index: {}]
  %s1 = inlined_call_operand.vmem [shape: f32[4], index: 1, kind: input, shape index: {}]
  %s2 = inlined_call_operand.<no memory space> [shape: f32[1], index: 2, kind: input, shape index: {}]
  %s3 = inlined_call_operand.hbm [shape: f32[2,4,256], index: 3, kind: output, shape index: {}]
  %s4 = sld [smem:[#allocation0]]
  $region30: #{tpu_custom_call.1} parent=0
    _
  %s6 = ssub.s32 1, %s4
  %s7 = scalar_select 0, %s6, %s4
  %8 = sst [smem:[#allocation2]] %s2
  $region1: #{tpu_custom_call.1} parent=0
    #allocation3 [shape = 'u8[8192]{0}', space=vmem, size = 0x2000, scoped, tag = 'input window, operand 0, single buffered']
    #allocation4 [shape = 's32[1]{0}', space=sflag, size = 0x4, scoped, tag = 'scoped memory for tpu_custom_call.1']
    #allocation5 [shape = 's32[1]{0}', space=sflag, size = 0x4, scoped, tag = 'scoped memory for tpu_custom_call.1']
    #allocation6 [shape = 's32[1]{0}', space=sflag, size = 0x4, scoped, tag = 'scoped memory for tpu_custom_call.1']
    #allocation7 [shape = 'u8[512]{0}', space=smem, size = 0x200, scoped, tag = 'input window, operand 1, single buffered']
    #allocation8 [shape = 'u8[8192]{0}', space=vmem, size = 0x2000, scoped, tag = 'output window, operand 0, single buffered']
    %9 = vsyncpa [#allocation4], 0
    %10 = vsyncpa [#allocation6], 0
    %11 = vsyncpa [#allocation5], 0
    // Predicated region
    $region2: #{tpu_custom_call.1} parent=1 // pred_check
      _
    $region3: #{tpu_custom_call.1} parent=1 // pred_check_branch
      %13 = sbr.rel (0) target = $region5
    $region4: #{tpu_custom_call.1} parent=1 // pred_region
      %s15 = ssub.s32 256, 256
      %16 = vsyncadd [#allocation4], %s15
      %s17 = sshll.u32 [#allocation3], 4
      %s18 = int_to_ptr.vmem [resolvable:$true] %s17
      %23 = dma.hbm_to_vmem [thread:$0]  %s0, 256, %s18, [#allocation4], 128, 128, 8
    $region5: #{tpu_custom_call.1} parent=1 // pred_fallthru
      _
    // Predicated region
    $region6: #{tpu_custom_call.1} parent=1 // pred_check
      _
    $region7: #{tpu_custom_call.1} parent=1 // pred_check_branch
      %25 = sbr.rel (0) target = $region9
    $region8: #{tpu_custom_call.1} parent=1 // pred_region
      %s27 = ssub.s32 16, 16
      %28 = vsyncadd [#allocation6], %s27
      %s30 = sshll.u32 %s1, 4
      %s31 = int_to_ptr.vmem [resolvable:$true] %s30
      %33 = dma.vmem_to_smem %s31, 16, [#allocation7], [#allocation6]
    $region9: #{tpu_custom_call.1} parent=1 // pred_fallthru
      _
    // Predicated region
    $region10: #{tpu_custom_call.1} parent=1 // pred_check
      _
    $region11: #{tpu_custom_call.1} parent=1 // pred_check_branch
      %35 = sbr.rel (0) target = $region13
    $region12: #{tpu_custom_call.1} parent=1 // pred_region
      _
    $region13: #{tpu_custom_call.1} parent=1 // pred_fallthru
      _
    // Predicated region
    $region14: #{tpu_custom_call.1} parent=1 // pred_check
      _
    $region15: #{tpu_custom_call.1} parent=1 // pred_check_branch
      %37 = sbr.rel (0) target = $region17
    $region16: #{tpu_custom_call.1} parent=1 // pred_region
      %38 = dma.done [#allocation4], 256
    $region17: #{tpu_custom_call.1} parent=1 // pred_fallthru
      _
    // Predicated region
    $region18: #{tpu_custom_call.1} parent=1 // pred_check
      _
    $region19: #{tpu_custom_call.1} parent=1 // pred_check_branch
      %40 = sbr.rel (0) target = $region21
    $region20: #{tpu_custom_call.1} parent=1 // pred_region
      %41 = dma.done [#allocation6], 16
    $region21: #{tpu_custom_call.1} parent=1 // pred_fallthru
      _
    %42 = sfence
    %v43 = vld [vmem:[#allocation3] sm:$0xff]
    %v44 = vld [vmem:[#allocation3 + $0x8] sm:$0xff]
    %s45 = sld [smem:[#allocation2]]
    %v46 = vstv %s45
    %s47 = sld [smem:[#allocation7]]
    %v48 = vstv %s47
    %v49 = vmul.f32 %v48, %v43
    %v50 = vmul.f32 %v48, %v44
    %v51 = vadd.f32 %v46, %v49
    %v52 = vadd.f32 %v46, %v50
    %s53 = sld [smem:[#allocation7 + $0x1]]
    %v54 = vstv %s53
    %v55 = vmul.f32 %v54, %v43
    %v56 = vmul.f32 %v54, %v44
    %v59 = vrot.slane %v55, 5
    %v60 = vrot.slane %v59, 4
    %v61 = vrot.slane %v56, 5
    %v62 = vrot.slane %v61, 4
    %v65 = vadd.f32 %v51, %v60
    %v66 = vadd.f32 %v52, %v62
    %s67 = sld [smem:[#allocation7 + $0x2]]
    %v68 = vstv %s67
    %v69 = vmul.f32 %v68, %v43
    %v70 = vmul.f32 %v68, %v44
    %v73 = vrot.slane %v69, 6
    %v74 = vrot.slane %v73, 4
    %v75 = vrot.slane %v70, 6
    %v76 = vrot.slane %v75, 4
    %v79 = vadd.f32 %v65, %v74
    %v80 = vadd.f32 %v66, %v76
    %s81 = sld [smem:[#allocation7 + $0x3]]
    %v82 = vstv %s81
    %v83 = vmul.f32 %v82, %v43
    %v84 = vmul.f32 %v82, %v44
    %v87 = vrot.slane %v83, 7
    %v88 = vrot.slane %v87, 4
    %v89 = vrot.slane %v84, 7
    %v90 = vrot.slane %v89, 4
    %v93 = vadd.f32 %v79, %v88
    %v94 = vadd.f32 %v80, %v90
    %v97 = vlaneseq
    %v98 = vshrl.u32 %v97, 7
    %v99 = vsub.s32 0, %v98
    %v100 = vrot.slane %v93, %v99
    %v101 = vlaneseq
    %v102 = vshrl.u32 %v101, 7
    %v103 = vsub.s32 4, %v102
    %v104 = vrot.slane %v93, %v103
    %v105 = vlaneseq
    %v106 = vshrl.u32 %v105, 7
    %v107 = vsub.s32 0, %v106
    %v108 = vrot.slane %v94, %v107
    %v109 = vlaneseq
    %v110 = vshrl.u32 %v109, 7
    %v111 = vsub.s32 4, %v110
    %v112 = vrot.slane %v94, %v111
    %v117 = vlaneseq
    %v118 = vshrl.u32 %v117, 7
    %v119 = vsub.s32 0, %v118
    %v120 = vrot.slane %v100, %v119
    %v121 = vlaneseq
    %v122 = vshrl.u32 %v121, 7
    %v123 = vsub.s32 0, %v122
    %v124 = vrot.slane %v104, %v123
    %v125 = vlaneseq
    %v126 = vshrl.u32 %v125, 7
    %v127 = vsub.s32 0, %v126
    %v128 = vrot.slane %v108, %v127
    %v129 = vlaneseq
    %v130 = vshrl.u32 %v129, 7
    %v131 = vsub.s32 0, %v130
    %v132 = vrot.slane %v112, %v131
    %v137 = vcombine.low %v120, %v124
    %v138 = vcombine.low %v128, %v132
    %v141 = vmul.f32 %v43, %v137
    %v142 = vmul.f32 %v44, %v138
    %143 = vst [vmem:[#allocation8] sm:$0xff] %v141
    %144 = vst [vmem:[#allocation8 + $0x8] sm:$0xff] %v142
    // Predicated region
    $region22: #{tpu_custom_call.1} parent=1 // pred_check
      _
    $region23: #{tpu_custom_call.1} parent=1 // pred_check_branch
      %146 = sbr.rel (0) target = $region25
    $region24: #{tpu_custom_call.1} parent=1 // pred_region
      %s148 = ssub.s32 256, 256
      %149 = vsyncadd [#allocation5], %s148
      %s150 = sshll.u32 [#allocation8], 4
      %s151 = int_to_ptr.vmem [resolvable:$true] %s150
      %156 = dma.vmem_to_hbm [thread:$0]  %s151, 256, %s3, [#allocation5], 128, 128, 8
    $region25: #{tpu_custom_call.1} parent=1 // pred_fallthru
      _
    // Predicated region
    $region26: #{tpu_custom_call.1} parent=1 // pred_check
      _
    $region27: #{tpu_custom_call.1} parent=1 // pred_check_branch
      %158 = sbr.rel (0) target = $region29
    $region28: #{tpu_custom_call.1} parent=1 // pred_region
      %159 = dma.done [#allocation5], 256
    $region29: #{tpu_custom_call.1} parent=1 // pred_fallthru
      _
    %160 = vsyncpa [#allocation4], 1
    %161 = vsyncpa [#allocation5], 1
    %162 = vsyncpa [#allocation6], 1

</llo_original>
